<compile_context>
chip_gen: v5e
topology: v5e:2x2
jax: 0.10.0
libtpu: 0.0.40
codegen_flags: <defaults>
</compile_context>

<pallas_src>
import jax
import jax.numpy as jnp
from jax.experimental import pallas as pl
from jax.experimental.pallas import tpu as pltpu


def _dense_kernel(x_ref, w_ref, o_ref):
    # x_ref : (2, K, TM)  stacked real/imag planes of X^T (lanes = lattice*gauge)
    # w_ref : (2, N, K)   stacked real/imag planes of W^T (resident, tiny)
    # o_ref : (2, N, TM)  stacked real/imag planes of the output (lane-dense)
    xr = x_ref[0]
    xi = x_ref[1]
    wr = w_ref[0]
    wi = w_ref[1]
    # (Wr + i Wi)(Xr + i Xi) = (Wr Xr - Wi Xi) + i (Wr Xi + Wi Xr)
    rr = jnp.dot(wr, xr, preferred_element_type=jnp.float32)
    ii = jnp.dot(wi, xi, preferred_element_type=jnp.float32)
    ri = jnp.dot(wr, xi, preferred_element_type=jnp.float32)
    ir = jnp.dot(wi, xr, preferred_element_type=jnp.float32)
    # f32 combine on full 128-lane vectors (unmasked stores)
    o_ref[0] = rr - ii
    o_ref[1] = ri + ir


def _complex_gemm_t(xs, ws, *, tm_target=2048):
    """Complex GEMM in transposed layout.

    xs : (2, K, M) float32   stacked re/im of X^T
    ws : (2, N, K) float32   stacked re/im of W^T
    returns (2, N, M) float32
    """
    _, K, M = xs.shape
    _, N, _ = ws.shape

    # Lane tile: multiple of 128, as large as reasonable (per-step DMA work
    # must dominate the ~0.35us grid-step overhead).  Tiny VMEM footprint
    # (2*K*tm + 2*N*tm floats, double-buffered) fits every generation.
    M128 = pl.cdiv(M, 128) * 128
    tm = M128 if M128 <= tm_target else tm_target
    M_pad = pl.cdiv(M, tm) * tm
    if M_pad != M:
        xs = jnp.pad(xs, ((0, 0), (0, 0), (0, M_pad - M)))

    grid = (M_pad // tm,)

    out = pl.pallas_call(
        _dense_kernel,
        out_shape=jax.ShapeDtypeStruct((2, N, M_pad), jnp.float32),
        grid_spec=pltpu.PrefetchScalarGridSpec(
            num_scalar_prefetch=0,
            grid=grid,
            in_specs=[
                pl.BlockSpec((2, K, tm), lambda i: (0, 0, i)),   # X^T lane tile
                pl.BlockSpec((2, N, K), lambda i: (0, 0, 0)),    # weights (resident)
            ],
            out_specs=pl.BlockSpec((2, N, tm), lambda i: (0, 0, i)),
        ),
        compiler_params=pltpu.CompilerParams(
            dimension_semantics=("parallel",)),   # lane tiles are independent (megacore on v7x)
    )(xs, ws)

    return out[:, :, :M]


def v_dense_forward(weights, features_in, *, tm=2048):
    """
    weights     : (n_in, n_out, 4, 4) complex
    features_in : (n_in, a, b, c, d, 4, G) complex
    returns     : (n_out, a, b, c, d, 4, G) complex64
    """
    n_in, n_out = weights.shape[0], weights.shape[1]
    I, a, b, c, d, S, G = features_in.shape
    if I != n_in:
        raise ValueError(f"shape mismatch: got {I} but expected {n_in}")
    assert S == 4 and weights.shape[2] == 4 and weights.shape[3] == 4

    M = a * b * c * d * G

    # X^T[i*4+k, m] = phi[i, x, k, g], m = flattened (a,b,c,d,G)
    Xt = jnp.transpose(features_in, (0, 5, 1, 2, 3, 4, 6)).reshape(n_in * 4, M)
    xs = jnp.stack([jnp.real(Xt), jnp.imag(Xt)], axis=0).astype(jnp.float32)

    # W^T[o*4+j, i*4+k] = W[i, o, j, k]
    Wt = jnp.transpose(weights, (1, 2, 0, 3)).reshape(n_out * 4, n_in * 4)
    ws = jnp.stack([jnp.real(Wt), jnp.imag(Wt)], axis=0).astype(jnp.float32)

    ys = _complex_gemm_t(xs, ws, tm_target=tm)          # (2, n_out*4, M)
    Y = (ys[0] + 1j * ys[1]).astype(jnp.complex64)      # (n_out*4, M)

    # back to (n_out, a, b, c, d, 4, G)
    out = jnp.transpose(Y.reshape(n_out, 4, a, b, c, d, G),
                        (0, 2, 3, 4, 5, 1, 6))
    return out


if __name__ == "__main__":
    key = jax.random.PRNGKey(0)
    k_wr, k_wi, k_xr, k_xi = jax.random.split(key, 4)

    n_in, n_out = 3, 2
    a, b, c, d = 2, 2, 4, 4
    G = 3

    # deterministic synthetic parameters (cdouble in torch -> complex64 here)
    weights = (jax.random.normal(k_wr, (n_in, n_out, 4, 4), dtype=jnp.float32)
               + 1j * jax.random.normal(k_wi, (n_in, n_out, 4, 4), dtype=jnp.float32)
               ).astype(jnp.complex64)

    features_in = (jax.random.normal(k_xr, (n_in, a, b, c, d, 4, G), dtype=jnp.float32)
                   + 1j * jax.random.normal(k_xi, (n_in, a, b, c, d, 4, G), dtype=jnp.float32)
                   ).astype(jnp.complex64)

    out = v_dense_forward(weights, features_in)
    out = jax.block_until_ready(out)

    # reference (plain JAX einsum, complex64)
    ref = jnp.einsum('iojk,iabcdkG->oabcdjG', weights, features_in)
    assert out.shape == ref.shape == (n_out, a, b, c, d, 4, G)
    assert jnp.max(jnp.abs(out - ref)) < 1e-3, "mismatch vs einsum reference"

    print("KERNEL_OK")
</pallas_src>

<mosaic_0001>
module attributes {stable_mosaic.version = 11 : i64} {
  func.func @_dense_kernel(%arg0: i32, %arg1: memref<2x12x256xf32, #tpu.memory_space<vmem>>, %arg2: memref<2x8x12xf32, #tpu.memory_space<vmem>>, %arg3: memref<2x8x256xf32, #tpu.memory_space<vmem>>) attributes {dimension_semantics = [#tpu.dimension_semantics<parallel>], iteration_bounds = array<i64: 1>, scalar_prefetch = 0 : i64, scratch_operands = 0 : i64, tpu.core_type = #tpu.core_type<tc>, window_params = [{transform_indices = @transform_0, window_bounds = array<i64: 2, 12, 256>}, {pipeline_mode = #tpu.pipeline_mode<synchronous>, transform_indices = @transform_1, window_bounds = array<i64: 2, 8, 12>}, {transform_indices = @transform_2, window_bounds = array<i64: 2, 8, 256>}]} {
    %c0 = arith.constant 0 : index
    %c0_0 = arith.constant 0 : index
    %c0_1 = arith.constant 0 : index
    %0 = vector.load %arg1[%c0, %c0_0, %c0_1] : memref<2x12x256xf32, #tpu.memory_space<vmem>>, vector<1x12x256xf32>
    %1 = vector.shape_cast %0 : vector<1x12x256xf32> to vector<12x256xf32>
    %c1 = arith.constant 1 : index
    %c0_2 = arith.constant 0 : index
    %c0_3 = arith.constant 0 : index
    %2 = vector.load %arg1[%c1, %c0_2, %c0_3] : memref<2x12x256xf32, #tpu.memory_space<vmem>>, vector<1x12x256xf32>
    %3 = vector.shape_cast %2 : vector<1x12x256xf32> to vector<12x256xf32>
    %c0_4 = arith.constant 0 : index
    %c0_5 = arith.constant 0 : index
    %c0_6 = arith.constant 0 : index
    %4 = vector.load %arg2[%c0_4, %c0_5, %c0_6] : memref<2x8x12xf32, #tpu.memory_space<vmem>>, vector<1x8x12xf32>
    %5 = vector.shape_cast %4 : vector<1x8x12xf32> to vector<8x12xf32>
    %c1_7 = arith.constant 1 : index
    %c0_8 = arith.constant 0 : index
    %c0_9 = arith.constant 0 : index
    %6 = vector.load %arg2[%c1_7, %c0_8, %c0_9] : memref<2x8x12xf32, #tpu.memory_space<vmem>>, vector<1x8x12xf32>
    %7 = vector.shape_cast %6 : vector<1x8x12xf32> to vector<8x12xf32>
    %cst = arith.constant dense<0.000000e+00> : vector<8x256xf32>
    %8 = tpu.matmul %5, %1, %cst {dimension_numbers = #tpu.dot_dimension_numbers<[1], [0], [0], [1], [0, 0, 1, 1], [], []>} : vector<8x12xf32>, vector<12x256xf32>, vector<8x256xf32> -> vector<8x256xf32>
    %cst_10 = arith.constant dense<0.000000e+00> : vector<8x256xf32>
    %9 = tpu.matmul %7, %3, %cst_10 {dimension_numbers = #tpu.dot_dimension_numbers<[1], [0], [0], [1], [0, 0, 1, 1], [], []>} : vector<8x12xf32>, vector<12x256xf32>, vector<8x256xf32> -> vector<8x256xf32>
    %cst_11 = arith.constant dense<0.000000e+00> : vector<8x256xf32>
    %10 = tpu.matmul %5, %3, %cst_11 {dimension_numbers = #tpu.dot_dimension_numbers<[1], [0], [0], [1], [0, 0, 1, 1], [], []>} : vector<8x12xf32>, vector<12x256xf32>, vector<8x256xf32> -> vector<8x256xf32>
    %cst_12 = arith.constant dense<0.000000e+00> : vector<8x256xf32>
    %11 = tpu.matmul %7, %1, %cst_12 {dimension_numbers = #tpu.dot_dimension_numbers<[1], [0], [0], [1], [0, 0, 1, 1], [], []>} : vector<8x12xf32>, vector<12x256xf32>, vector<8x256xf32> -> vector<8x256xf32>
    %12 = arith.subf %8, %9 : vector<8x256xf32>
    %c0_13 = arith.constant 0 : index
    %c0_14 = arith.constant 0 : index
    %c0_15 = arith.constant 0 : index
    %13 = vector.load %arg3[%c0_13, %c0_14, %c0_15] : memref<2x8x256xf32, #tpu.memory_space<vmem>>, vector<1x8x256xf32>
    %14 = vector.shape_cast %13 : vector<1x8x256xf32> to vector<8x256xf32>
    %15 = vector.shape_cast %12 : vector<8x256xf32> to vector<1x8x256xf32>
    tpu.vector_store %arg3[%c0_13, %c0_14, %c0_15], %15 {strides = array<i32>} : memref<2x8x256xf32, #tpu.memory_space<vmem>>, vector<1x8x256xf32>,
    %16 = arith.addf %10, %11 : vector<8x256xf32>
    %c1_16 = arith.constant 1 : index
    %c0_17 = arith.constant 0 : index
    %c0_18 = arith.constant 0 : index
    %17 = vector.load %arg3[%c1_16, %c0_17, %c0_18] : memref<2x8x256xf32, #tpu.memory_space<vmem>>, vector<1x8x256xf32>
    %18 = vector.shape_cast %17 : vector<1x8x256xf32> to vector<8x256xf32>
    %19 = vector.shape_cast %16 : vector<8x256xf32> to vector<1x8x256xf32>
    tpu.vector_store %arg3[%c1_16, %c0_17, %c0_18], %19 {strides = array<i32>} : memref<2x8x256xf32, #tpu.memory_space<vmem>>, vector<1x8x256xf32>,
    return
  }
  func.func @transform_0(%arg0: i32) -> (i32, i32, i32) {
    %c0_i32 = arith.constant 0 : i32
    %c0_i32_0 = arith.constant 0 : i32
    %c0_i32_1 = arith.constant 0 : i32
    return %c0_i32, %c0_i32_0, %arg0 : i32, i32, i32
  }
  func.func @transform_1(%arg0: i32) -> (i32, i32, i32) {
    %c0_i32 = arith.constant 0 : i32
    %c0_i32_0 = arith.constant 0 : i32
    %c0_i32_1 = arith.constant 0 : i32
    %c0_i32_2 = arith.constant 0 : i32
    return %c0_i32, %c0_i32_0, %c0_i32_1 : i32, i32, i32
  }
  func.func @transform_2(%arg0: i32) -> (i32, i32, i32) {
    %c0_i32 = arith.constant 0 : i32
    %c0_i32_0 = arith.constant 0 : i32
    %c0_i32_1 = arith.constant 0 : i32
    return %c0_i32, %c0_i32_0, %arg0 : i32, i32, i32
  }
}

</mosaic_0001>

<llo_original>
// kernel: tpu_custom_call.1
$region0: #{tpu_custom_call.1}
  #allocation0 [shape = 'u32[]', space=smem, size = 0x4, offset = 0x4, fixed_abs, tag = 'smem constant byte address 0x4 - core index']
  #allocation1 [shape = 'u32[72,128]{1,0:T(1,128)}', space=vmem, size = 0x9000, scoped, tag = 'internal scratch']
  %s0 = inlined_call_operand.vmem [shape: f32[2,12,256], index: 0, kind: input, shape index: {}]
  %s1 = inlined_call_operand.vmem [shape: f32[2,8,12], index: 1, kind: input, shape index: {}]
  %s2 = inlined_call_operand.hbm [shape: f32[2,8,256], index: 2, kind: output, shape index: {}]
  %s3 = sld [smem:[#allocation0]]
  $region18: #{tpu_custom_call.1} parent=0
    _
  %s5 = ssub.s32 1, %s3
  %s6 = scalar_select 0, %s5, %s3
  $region1: #{tpu_custom_call.1} parent=0
    #allocation2 [shape = 'u8[16384]{0}', space=vmem, size = 0x4000, scoped, tag = 'output window, operand 0, single buffered']
    #allocation3 [shape = 's32[1]{0}', space=sflag, size = 0x4, scoped, tag = 'scoped memory for tpu_custom_call.1']
    %7 = vsyncpa [#allocation3], 0
    // Predicated region
    $region2: #{tpu_custom_call.1} parent=1 // pred_check
      _
    $region3: #{tpu_custom_call.1} parent=1 // pred_check_branch
      %9 = sbr.rel (0) target = $region5
    $region4: #{tpu_custom_call.1} parent=1 // pred_region
      _
    $region5: #{tpu_custom_call.1} parent=1 // pred_fallthru
      _
    // Predicated region
    $region6: #{tpu_custom_call.1} parent=1 // pred_check
      _
    $region7: #{tpu_custom_call.1} parent=1 // pred_check_branch
      %11 = sbr.rel (0) target = $region9
    $region8: #{tpu_custom_call.1} parent=1 // pred_region
      _
    $region9: #{tpu_custom_call.1} parent=1 // pred_fallthru
      _
    %v12 = vld [vmem:[%s0] sm:$0xff]
    %v13 = vld [vmem:[%s0 + $0x8] sm:$0xff]
    %v14 = vld [vmem:[%s0 + $0x10] sm:$0xf]
    %v15 = vld [vmem:[%s0 + $0x18] sm:$0xf]
    %s16 = scalar_lea.vmem %s0, 32
    %v17 = vld [vmem:[%s16] sm:$0xff]
    %v18 = vld [vmem:[%s16 + $0x8] sm:$0xff]
    %v19 = vld [vmem:[%s16 + $0x10] sm:$0xf]
    %v20 = vld [vmem:[%s16 + $0x18] sm:$0xf]
    %v21 = vld [vmem:[%s1] sm:$0xff]
    %s22 = scalar_lea.vmem %s1, 8
    %v23 = vld [vmem:[%s22] sm:$0xff]
    %vm24 = vcmask 97280
    %v26 = vsel %vm24, %v21, 0
    %vm28 = vcmask 1043456
    %v30 = vsel %vm28, %v14, 0
    %v33 = vsel %vm28, %v15, 0
    %35 = vmatpush.msra.mxu0 0.0
    %36 = vmatpush.msra.mxu0 0.0
    %37 = vmatpush.msra.mxu0 0.0
    %38 = vmatpush.msra.mxu0 0.0
    %39 = vmatpush.msra.mxu0 0.0
    %40 = vmatpush.msra.mxu0 0.0
    %41 = vmatpush.msra.mxu0 0.0
    %42 = vmatpush.msra.mxu0 0.0
    %43 = vmatpush.msra.mxu0 0.0
    %44 = vmatpush.msra.mxu0 0.0
    %45 = vmatpush.msra.mxu0 0.0
    %46 = vmatpush.msra.mxu0 0.0
    %47 = vmatpush.msra.mxu0 0.0
    %48 = vmatpush.msra.mxu0 0.0
    %49 = vmatpush.msra.mxu0 %v30
    %50 = vmatpush.msra.mxu0 %v12
    %51 = vmatmul.f32.gmra.mxu0 %v26
    %v52 = vpop.f32.mrf.mxu0
    %v53 = vadd.f32 0.0, %v52
    %54 = vdwg.mxu0
    %55 = vmatpush.msra.mxu0 0.0
    %56 = vmatpush.msra.mxu0 0.0
    %57 = vmatpush.msra.mxu0 0.0
    %58 = vmatpush.msra.mxu0 0.0
    %59 = vmatpush.msra.mxu0 0.0
    %60 = vmatpush.msra.mxu0 0.0
    %61 = vmatpush.msra.mxu0 0.0
    %62 = vmatpush.msra.mxu0 0.0
    %63 = vmatpush.msra.mxu0 0.0
    %64 = vmatpush.msra.mxu0 0.0
    %65 = vmatpush.msra.mxu0 0.0
    %66 = vmatpush.msra.mxu0 0.0
    %67 = vmatpush.msra.mxu0 0.0
    %68 = vmatpush.msra.mxu0 0.0
    %69 = vmatpush.msra.mxu0 %v33
    %70 = vmatpush.msra.mxu0 %v13
    %71 = vmatmul.f32.gmra.mxu0 %v26
    %v72 = vpop.f32.mrf.mxu0
    %v73 = vadd.f32 0.0, %v72
    %74 = vdwg.mxu0
    %v76 = vsel %vm24, %v23, 0
    %v79 = vsel %vm28, %v19, 0
    %v82 = vsel %vm28, %v20, 0
    %84 = vmatpush.msra.mxu0 0.0
    %85 = vmatpush.msra.mxu0 0.0
    %86 = vmatpush.msra.mxu0 0.0
    %87 = vmatpush.msra.mxu0 0.0
    %88 = vmatpush.msra.mxu0 0.0
    %89 = vmatpush.msra.mxu0 0.0
    %90 = vmatpush.msra.mxu0 0.0
    %91 = vmatpush.msra.mxu0 0.0
    %92 = vmatpush.msra.mxu0 0.0
    %93 = vmatpush.msra.mxu0 0.0
    %94 = vmatpush.msra.mxu0 0.0
    %95 = vmatpush.msra.mxu0 0.0
    %96 = vmatpush.msra.mxu0 0.0
    %97 = vmatpush.msra.mxu0 0.0
    %98 = vmatpush.msra.mxu0 %v79
    %99 = vmatpush.msra.mxu0 %v17
    %100 = vmatmul.f32.gmra.mxu0 %v76
    %v101 = vpop.f32.mrf.mxu0
    %v102 = vadd.f32 0.0, %v101
    %103 = vdwg.mxu0
    %104 = vmatpush.msra.mxu0 0.0
    %105 = vmatpush.msra.mxu0 0.0
    %106 = vmatpush.msra.mxu0 0.0
    %107 = vmatpush.msra.mxu0 0.0
    %108 = vmatpush.msra.mxu0 0.0
    %109 = vmatpush.msra.mxu0 0.0
    %110 = vmatpush.msra.mxu0 0.0
    %111 = vmatpush.msra.mxu0 0.0
    %112 = vmatpush.msra.mxu0 0.0
    %113 = vmatpush.msra.mxu0 0.0
    %114 = vmatpush.msra.mxu0 0.0
    %115 = vmatpush.msra.mxu0 0.0
    %116 = vmatpush.msra.mxu0 0.0
    %117 = vmatpush.msra.mxu0 0.0
    %118 = vmatpush.msra.mxu0 %v82
    %119 = vmatpush.msra.mxu0 %v18
    %120 = vmatmul.f32.gmra.mxu0 %v76
    %v121 = vpop.f32.mrf.mxu0
    %v122 = vadd.f32 0.0, %v121
    %123 = vdwg.mxu0
    %124 = vmatpush.msra.mxu0 0.0
    %125 = vmatpush.msra.mxu0 0.0
    %126 = vmatpush.msra.mxu0 0.0
    %127 = vmatpush.msra.mxu0 0.0
    %128 = vmatpush.msra.mxu0 0.0
    %129 = vmatpush.msra.mxu0 0.0
    %130 = vmatpush.msra.mxu0 0.0
    %131 = vmatpush.msra.mxu0 0.0
    %132 = vmatpush.msra.mxu0 0.0
    %133 = vmatpush.msra.mxu0 0.0
    %134 = vmatpush.msra.mxu0 0.0
    %135 = vmatpush.msra.mxu0 0.0
    %136 = vmatpush.msra.mxu0 0.0
    %137 = vmatpush.msra.mxu0 0.0
    %138 = vmatpush.msra.mxu0 %v30
    %139 = vmatpush.msra.mxu0 %v12
    %140 = vmatmul.f32.gmra.mxu0 %v76
    %v141 = vpop.f32.mrf.mxu0
    %v142 = vadd.f32 0.0, %v141
    %143 = vdwg.mxu0
    %144 = vmatpush.msra.mxu0 0.0
    %145 = vmatpush.msra.mxu0 0.0
    %146 = vmatpush.msra.mxu0 0.0
    %147 = vmatpush.msra.mxu0 0.0
    %148 = vmatpush.msra.mxu0 0.0
    %149 = vmatpush.msra.mxu0 0.0
    %150 = vmatpush.msra.mxu0 0.0
    %151 = vmatpush.msra.mxu0 0.0
    %152 = vmatpush.msra.mxu0 0.0
    %153 = vmatpush.msra.mxu0 0.0
    %154 = vmatpush.msra.mxu0 0.0
    %155 = vmatpush.msra.mxu0 0.0
    %156 = vmatpush.msra.mxu0 0.0
    %157 = vmatpush.msra.mxu0 0.0
    %158 = vmatpush.msra.mxu0 %v33
    %159 = vmatpush.msra.mxu0 %v13
    %160 = vmatmul.f32.gmra.mxu0 %v76
    %v161 = vpop.f32.mrf.mxu0
    %v162 = vadd.f32 0.0, %v161
    %163 = vdwg.mxu0
    %v164 = vsub.f32 %v53, %v102
    %v165 = vsub.f32 %v73, %v122
    %166 = vst [vmem:[#allocation2] sm:$0xff] %v164
    %167 = vst [vmem:[#allocation2 + $0x8] sm:$0xff] %v165
    %168 = vmatpush.msra.mxu0 0.0
    %169 = vmatpush.msra.mxu0 0.0
    %170 = vmatpush.msra.mxu0 0.0
    %171 = vmatpush.msra.mxu0 0.0
    %172 = vmatpush.msra.mxu0 0.0
    %173 = vmatpush.msra.mxu0 0.0
    %174 = vmatpush.msra.mxu0 0.0
    %175 = vmatpush.msra.mxu0 0.0
    %176 = vmatpush.msra.mxu0 0.0
    %177 = vmatpush.msra.mxu0 0.0
    %178 = vmatpush.msra.mxu0 0.0
    %179 = vmatpush.msra.mxu0 0.0
    %180 = vmatpush.msra.mxu0 0.0
    %181 = vmatpush.msra.mxu0 0.0
    %182 = vmatpush.msra.mxu0 %v79
    %183 = vmatpush.msra.mxu0 %v17
    %184 = vmatmul.f32.gmra.mxu0 %v26
    %v185 = vpop.f32.mrf.mxu0
    %v186 = vadd.f32 %v142, %v185
    %187 = vdwg.mxu0
    %188 = vmatpush.msra.mxu0 0.0
    %189 = vmatpush.msra.mxu0 0.0
    %190 = vmatpush.msra.mxu0 0.0
    %191 = vmatpush.msra.mxu0 0.0
    %192 = vmatpush.msra.mxu0 0.0
    %193 = vmatpush.msra.mxu0 0.0
    %194 = vmatpush.msra.mxu0 0.0
    %195 = vmatpush.msra.mxu0 0.0
    %196 = vmatpush.msra.mxu0 0.0
    %197 = vmatpush.msra.mxu0 0.0
    %198 = vmatpush.msra.mxu0 0.0
    %199 = vmatpush.msra.mxu0 0.0
    %200 = vmatpush.msra.mxu0 0.0
    %201 = vmatpush.msra.mxu0 0.0
    %202 = vmatpush.msra.mxu0 %v82
    %203 = vmatpush.msra.mxu0 %v18
    %204 = vmatmul.f32.gmra.mxu0 %v26
    %v205 = vpop.f32.mrf.mxu0
    %v206 = vadd.f32 %v162, %v205
    %207 = vdwg.mxu0
    %s208 = scalar_lea.vmem [#allocation2], 16
    %209 = vst [vmem:[%s208] sm:$0xff] %v186
    %210 = vst [vmem:[%s208 + $0x8] sm:$0xff] %v206
    // Predicated region
    $region10: #{tpu_custom_call.1} parent=1 // pred_check
      _
    $region11: #{tpu_custom_call.1} parent=1 // pred_check_branch
      %212 = sbr.rel (0) target = $region13
    $region12: #{tpu_custom_call.1} parent=1 // pred_region
      %214 = vsyncadd [#allocation3], 0
      %s215 = sshll.u32 [#allocation2], 4
      %s216 = int_to_ptr.vmem [resolvable:$true] %s215
      %s217 = sshll.u32 %s2, 4
      %s218 = int_to_ptr.hbm [resolvable:$true] %s217
      %223 = dma.vmem_to_hbm [thread:$0]  %s216, 512, %s218, [#allocation3], 256, 256, 16
    $region13: #{tpu_custom_call.1} parent=1 // pred_fallthru
      _
    // Predicated region
    $region14: #{tpu_custom_call.1} parent=1 // pred_check
      _
    $region15: #{tpu_custom_call.1} parent=1 // pred_check_branch
      %225 = sbr.rel (0) target = $region17
    $region16: #{tpu_custom_call.1} parent=1 // pred_region
      %227 = dma.done [#allocation3], 512
    $region17: #{tpu_custom_call.1} parent=1 // pred_fallthru
      _
    %228 = vsyncpa [#allocation3], 1

</llo_original>
